<compile_context>
chip_gen: v7x
topology: tpu7x:2x2x1
jax: 0.10.0
libtpu: 0.0.40
codegen_flags: <defaults>
</compile_context>

<pallas_src>
import functools

import jax
import jax.numpy as jnp
from jax.experimental import pallas as pl
from jax.experimental.pallas import tpu as pltpu

LANE = 128


def _round_up(n, m):
    return ((n + m - 1) // m) * m


def mlp_kernel(x_ref, w1_ref, b1_ref, w2_ref, b2_ref, w3_ref, b3_ref, o_ref):
    x = x_ref[...]            # (TILE_N, in_f)  f32, in_f is tiny (2)
    w1 = w1_ref[...]          # (in_f, H_PAD)   f32

    # fc1 (+ folded bn1) as K unrolled broadcast FMAs on the VPU (K is tiny; MXU would
    # be <2% utilized). Dropout is identity in eval mode.
    h = b1_ref[...] + x[:, 0:1] * w1[0:1, :]
    for c in range(1, x.shape[1]):
        h = h + x[:, c:c + 1] * w1[c:c + 1, :]
    h = jnp.maximum(h, 0.01 * h)                             # LeakyReLU(0.01), f32

    # fc2 (+ folded bn2): bf16 MXU matmul (full tile as M), f32 accumulation, fused epilogue.
    h = jnp.dot(h.astype(jnp.bfloat16), w2_ref[...],
                preferred_element_type=jnp.float32) + b2_ref[...]
    h = jnp.maximum(h, 0.01 * h)

    # fc3 (single output column): VPU multiply + lane reduction (XLU), all f32.
    # Padded hidden columns of h are zero and w3 is zero-padded, so the reduce is exact.
    o_ref[...] = jnp.sum(h * w3_ref[...], axis=-1, keepdims=True) + b3_ref[...]


@functools.partial(jax.jit, static_argnames=("out_features", "tile_n_cap"))
def mlp_forward(x, params, out_features, tile_n_cap=4096):
    """x: (N, input_size) f32 -> (N, out_features) f32 using padded/folded params."""
    w1, b1, w2, b2, w3, b3 = params
    N, in_f = x.shape
    h_pad = w1.shape[1]

    # Row tile: multiple of 8 sublanes, capped for VMEM, and sized so the grid has >=4
    # steps when the batch is large enough (keeps both v7x TensorCores busy).
    tile_n = min(tile_n_cap, max(8, _round_up(-(-N // 4), 8)))
    n_pad = _round_up(max(N, 1), tile_n)
    if n_pad != N:
        x = jnp.pad(x, ((0, n_pad - N), (0, 0)))
    grid = (n_pad // tile_n,)

    const_map = lambda i: (0, 0)
    cost = pl.CostEstimate(
        flops=2 * n_pad * (in_f * h_pad + h_pad * h_pad + h_pad * 1),
        transcendentals=0,
        bytes_accessed=(4 * n_pad * (in_f + 1)
                        + 4 * (w1.size + b1.size + b2.size + w3.size + b3.size)
                        + 2 * w2.size),
    )

    out = pl.pallas_call(
        mlp_kernel,
        out_shape=jax.ShapeDtypeStruct((n_pad, 1), jnp.float32),
        grid_spec=pltpu.PrefetchScalarGridSpec(
            num_scalar_prefetch=0,
            grid=grid,
            in_specs=[
                pl.BlockSpec((tile_n, in_f), lambda i: (i, 0)),   # x: row-tiled
                pl.BlockSpec(w1.shape, const_map),                # weights: VMEM-resident
                pl.BlockSpec(b1.shape, const_map),
                pl.BlockSpec(w2.shape, const_map),
                pl.BlockSpec(b2.shape, const_map),
                pl.BlockSpec(w3.shape, const_map),
                pl.BlockSpec(b3.shape, const_map),
            ],
            out_specs=pl.BlockSpec((tile_n, 1), lambda i: (i, 0)),  # narrow (1-lane) output
        ),
        compiler_params=pltpu.CompilerParams(
            dimension_semantics=("parallel",),   # shard batch tiles across TCs (v7x)
            vmem_limit_bytes=32 << 20,           # raise v5e's 16 MiB default; <= v6e/v7x defaults
        ),
        cost_estimate=cost,
    )(x, w1, b1, w2, b2, w3, b3)

    return out[:N, :out_features]


def init_raw_params(key, input_size, hidden_size, output_size):
    """Raw PyTorch-equivalent params (Linear weights stored as (in, out))."""
    ks = jax.random.split(key, 6)

    def linear(kw, kb, fan_in, fan_out):
        bound = 1.0 / jnp.sqrt(jnp.float32(fan_in))
        w = jax.random.uniform(kw, (fan_in, fan_out), jnp.float32, -bound, bound)
        b = jax.random.uniform(kb, (fan_out,), jnp.float32, -bound, bound)
        return w, b

    w1, b1 = linear(ks[0], ks[1], input_size, hidden_size)
    w2, b2 = linear(ks[2], ks[3], hidden_size, hidden_size)
    w3, b3 = linear(ks[4], ks[5], hidden_size, output_size)

    ones = jnp.ones((hidden_size,), jnp.float32)
    zeros = jnp.zeros((hidden_size,), jnp.float32)
    # (gamma, beta, running_mean, running_var) for bn1 and bn2 (fresh-module eval state).
    return (w1, b1, ones, zeros, zeros, ones,
            w2, b2, ones, zeros, zeros, ones,
            w3, b3)


def prepare_params(raw, eps=1e-5):
    """Fold eval-mode BN into the Linears, pad hidden to 128 lanes, cast the MXU weight to bf16."""
    (w1, b1, g1, be1, rm1, rv1,
     w2, b2, g2, be2, rm2, rv2,
     w3, b3) = raw
    in_f, hidden = w1.shape
    out_f = w3.shape[1]
    assert out_f == 1, "VPU fc3 path assumes a single output column (as in the spec)"
    h_pad = _round_up(hidden, LANE)

    s1 = g1 / jnp.sqrt(rv1 + eps)
    t1 = be1 - rm1 * s1
    s2 = g2 / jnp.sqrt(rv2 + eps)
    t2 = be2 - rm2 * s2
    w1f, b1f = w1 * s1[None, :], b1 * s1 + t1
    w2f, b2f = w2 * s2[None, :], b2 * s2 + t2

    def pad2(a, r, c):
        return jnp.pad(a, ((0, r - a.shape[0]), (0, c - a.shape[1])))

    def pad_row(v, c):
        return jnp.pad(v, (0, c - v.shape[0]))[None, :]

    w1p = pad2(w1f, in_f, h_pad)                          # (in_f, 128)  f32 (VPU path)
    b1p = pad_row(b1f, h_pad)                             # (1, 128)     f32
    w2p = pad2(w2f, h_pad, h_pad).astype(jnp.bfloat16)    # (128, 128)   bf16 (MXU)
    b2p = pad_row(b2f, h_pad)                             # (1, 128)     f32
    w3p = pad2(w3, h_pad, out_f).T                        # (1, 128)     f32 (VPU/XLU path)
    b3p = b3.reshape(1, 1).astype(jnp.float32)            # (1, 1)       f32

    return (w1p, b1p, w2p, b2p, w3p, b3p), out_f


def mlp_reference(x, raw, eps=1e-5):
    """Pure-JAX f32 eval-mode reference (matches the PyTorch module in eval())."""
    (w1, b1, g1, be1, rm1, rv1,
     w2, b2, g2, be2, rm2, rv2,
     w3, b3) = raw
    h = x @ w1 + b1
    h = (h - rm1) / jnp.sqrt(rv1 + eps) * g1 + be1
    h = jnp.where(h > 0, h, 0.01 * h)
    h = h @ w2 + b2
    h = (h - rm2) / jnp.sqrt(rv2 + eps) * g2 + be2
    h = jnp.where(h > 0, h, 0.01 * h)
    return h @ w3 + b3


if __name__ == "__main__":
    hidden_size = 100
    input_size = 2     # column_stack((time, data_norm)) -> 2 features
    output_size = 1    # data_norm has 1 column
    batch = 8

    key = jax.random.PRNGKey(0)
    k_x, k_p = jax.random.split(key)

    # synthetic "(time, normalized data)" input, shape (N, 2)
    time_col = jnp.linspace(0.0, 1.0, batch, dtype=jnp.float32)[:, None]
    data_col = jax.random.normal(k_x, (batch, 1), jnp.float32)
    x = jnp.concatenate([time_col, data_col], axis=1)

    raw = init_raw_params(k_p, input_size, hidden_size, output_size)
    params, out_f = prepare_params(raw)

    out = mlp_forward(x, params, out_f)
    jax.block_until_ready(out)
    assert out.shape == (batch, output_size)

    ref = mlp_reference(x, raw)
    assert jnp.allclose(out, ref, rtol=2e-2, atol=2e-2), "kernel/reference mismatch"

    print("KERNEL_OK")
</pallas_src>

<mosaic_0001>
module attributes {stable_mosaic.version = 11 : i64} {
  func.func @mlp_kernel(%arg0: i32, %arg1: memref<8x2xf32, #tpu.memory_space<vmem>>, %arg2: memref<2x128xf32, #tpu.memory_space<vmem>>, %arg3: memref<1x128xf32, #tpu.memory_space<vmem>>, %arg4: memref<128x128xbf16, #tpu.memory_space<vmem>>, %arg5: memref<1x128xf32, #tpu.memory_space<vmem>>, %arg6: memref<1x128xf32, #tpu.memory_space<vmem>>, %arg7: memref<1x1xf32, #tpu.memory_space<vmem>>, %arg8: memref<8x1xf32, #tpu.memory_space<vmem>>) attributes {dimension_semantics = [#tpu.dimension_semantics<parallel>], iteration_bounds = array<i64: 1>, scalar_prefetch = 0 : i64, scratch_operands = 0 : i64, tpu.core_type = #tpu.core_type<tc>, window_params = [{transform_indices = @transform_0, window_bounds = array<i64: 8, 2>}, {pipeline_mode = #tpu.pipeline_mode<synchronous>, transform_indices = @transform_1, window_bounds = array<i64: 2, 128>}, {pipeline_mode = #tpu.pipeline_mode<synchronous>, transform_indices = @transform_2, window_bounds = array<i64: 1, 128>}, {pipeline_mode = #tpu.pipeline_mode<synchronous>, transform_indices = @transform_3, window_bounds = array<i64: 128, 128>}, {pipeline_mode = #tpu.pipeline_mode<synchronous>, transform_indices = @transform_4, window_bounds = array<i64: 1, 128>}, {pipeline_mode = #tpu.pipeline_mode<synchronous>, transform_indices = @transform_5, window_bounds = array<i64: 1, 128>}, {pipeline_mode = #tpu.pipeline_mode<synchronous>, transform_indices = @transform_6, window_bounds = array<i64: 1, 1>}, {transform_indices = @transform_7, window_bounds = array<i64: 8, 1>}]} {
    %c0 = arith.constant 0 : index
    %c0_0 = arith.constant 0 : index
    %0 = vector.load %arg1[%c0, %c0_0] : memref<8x2xf32, #tpu.memory_space<vmem>>, vector<8x2xf32>
    %c0_1 = arith.constant 0 : index
    %c0_2 = arith.constant 0 : index
    %1 = vector.load %arg2[%c0_1, %c0_2] : memref<2x128xf32, #tpu.memory_space<vmem>>, vector<2x128xf32>
    %c0_3 = arith.constant 0 : index
    %c0_4 = arith.constant 0 : index
    %2 = vector.load %arg3[%c0_3, %c0_4] : memref<1x128xf32, #tpu.memory_space<vmem>>, vector<1x128xf32>
    %3 = vector.extract_strided_slice %0 {offsets = [0, 0], sizes = [8, 1], strides = [1, 1]} : vector<8x2xf32> to vector<8x1xf32>
    %4 = vector.extract_strided_slice %1 {offsets = [0, 0], sizes = [1, 128], strides = [1, 1]} : vector<2x128xf32> to vector<1x128xf32>
    %5 = vector.broadcast %3 : vector<8x1xf32> to vector<8x128xf32>
    %6 = vector.broadcast %4 : vector<1x128xf32> to vector<8x128xf32>
    %7 = arith.mulf %5, %6 : vector<8x128xf32>
    %8 = vector.broadcast %2 : vector<1x128xf32> to vector<8x128xf32>
    %9 = arith.addf %8, %7 : vector<8x128xf32>
    %10 = vector.extract_strided_slice %0 {offsets = [0, 1], sizes = [8, 1], strides = [1, 1]} : vector<8x2xf32> to vector<8x1xf32>
    %11 = vector.extract_strided_slice %1 {offsets = [1, 0], sizes = [1, 128], strides = [1, 1]} : vector<2x128xf32> to vector<1x128xf32>
    %12 = vector.broadcast %10 : vector<8x1xf32> to vector<8x128xf32>
    %13 = vector.broadcast %11 : vector<1x128xf32> to vector<8x128xf32>
    %14 = arith.mulf %12, %13 : vector<8x128xf32>
    %15 = arith.addf %9, %14 : vector<8x128xf32>
    %cst = arith.constant 0.00999999977 : f32
    %16 = vector.broadcast %cst : f32 to vector<8x128xf32>
    %17 = arith.mulf %16, %15 : vector<8x128xf32>
    %18 = arith.maximumf %15, %17 : vector<8x128xf32>
    %19 = arith.truncf %18 : vector<8x128xf32> to vector<8x128xbf16>
    %c0_5 = arith.constant 0 : index
    %c0_6 = arith.constant 0 : index
    %20 = vector.load %arg4[%c0_5, %c0_6] : memref<128x128xbf16, #tpu.memory_space<vmem>>, vector<128x128xbf16>
    %cst_7 = arith.constant dense<0.000000e+00> : vector<8x128xf32>
    %21 = tpu.matmul %19, %20, %cst_7 {dimension_numbers = #tpu.dot_dimension_numbers<[1], [0], [0], [1], [0, 0, 1, 1], [], []>} : vector<8x128xbf16>, vector<128x128xbf16>, vector<8x128xf32> -> vector<8x128xf32>
    %c0_8 = arith.constant 0 : index
    %c0_9 = arith.constant 0 : index
    %22 = vector.load %arg5[%c0_8, %c0_9] : memref<1x128xf32, #tpu.memory_space<vmem>>, vector<1x128xf32>
    %23 = vector.broadcast %22 : vector<1x128xf32> to vector<8x128xf32>
    %24 = arith.addf %21, %23 : vector<8x128xf32>
    %cst_10 = arith.constant 0.00999999977 : f32
    %25 = vector.broadcast %cst_10 : f32 to vector<8x128xf32>
    %26 = arith.mulf %25, %24 : vector<8x128xf32>
    %27 = arith.maximumf %24, %26 : vector<8x128xf32>
    %c0_11 = arith.constant 0 : index
    %c0_12 = arith.constant 0 : index
    %28 = vector.load %arg6[%c0_11, %c0_12] : memref<1x128xf32, #tpu.memory_space<vmem>>, vector<1x128xf32>
    %29 = vector.broadcast %28 : vector<1x128xf32> to vector<8x128xf32>
    %30 = arith.mulf %27, %29 : vector<8x128xf32>
    %cst_13 = arith.constant dense<0.000000e+00> : vector<8xf32>
    %31 = vector.multi_reduction <add>, %30, %cst_13 [1] : vector<8x128xf32> to vector<8xf32>
    %32 = vector.shape_cast %31 : vector<8xf32> to vector<8x1xf32>
    %c0_14 = arith.constant 0 : index
    %c0_15 = arith.constant 0 : index
    %33 = vector.load %arg7[%c0_14, %c0_15] : memref<1x1xf32, #tpu.memory_space<vmem>>, vector<1x1xf32>
    %34 = vector.broadcast %33 : vector<1x1xf32> to vector<8x1xf32>
    %35 = arith.addf %32, %34 : vector<8x1xf32>
    %c0_16 = arith.constant 0 : index
    %c0_17 = arith.constant 0 : index
    %36 = vector.load %arg8[%c0_16, %c0_17] : memref<8x1xf32, #tpu.memory_space<vmem>>, vector<8x1xf32>
    tpu.vector_store %arg8[%c0_16, %c0_17], %35 {strides = array<i32>} : memref<8x1xf32, #tpu.memory_space<vmem>>, vector<8x1xf32>,
    return
  }
  func.func @transform_0(%arg0: i32) -> (i32, i32) {
    %c0_i32 = arith.constant 0 : i32
    %c0_i32_0 = arith.constant 0 : i32
    return %arg0, %c0_i32 : i32, i32
  }
  func.func @transform_1(%arg0: i32) -> (i32, i32) {
    %c0_i32 = arith.constant 0 : i32
    %c0_i32_0 = arith.constant 0 : i32
    %c0_i32_1 = arith.constant 0 : i32
    return %c0_i32, %c0_i32_0 : i32, i32
  }
  func.func @transform_2(%arg0: i32) -> (i32, i32) {
    %c0_i32 = arith.constant 0 : i32
    %c0_i32_0 = arith.constant 0 : i32
    %c0_i32_1 = arith.constant 0 : i32
    return %c0_i32, %c0_i32_0 : i32, i32
  }
  func.func @transform_3(%arg0: i32) -> (i32, i32) {
    %c0_i32 = arith.constant 0 : i32
    %c0_i32_0 = arith.constant 0 : i32
    %c0_i32_1 = arith.constant 0 : i32
    return %c0_i32, %c0_i32_0 : i32, i32
  }
  func.func @transform_4(%arg0: i32) -> (i32, i32) {
    %c0_i32 = arith.constant 0 : i32
    %c0_i32_0 = arith.constant 0 : i32
    %c0_i32_1 = arith.constant 0 : i32
    return %c0_i32, %c0_i32_0 : i32, i32
  }
  func.func @transform_5(%arg0: i32) -> (i32, i32) {
    %c0_i32 = arith.constant 0 : i32
    %c0_i32_0 = arith.constant 0 : i32
    %c0_i32_1 = arith.constant 0 : i32
    return %c0_i32, %c0_i32_0 : i32, i32
  }
  func.func @transform_6(%arg0: i32) -> (i32, i32) {
    %c0_i32 = arith.constant 0 : i32
    %c0_i32_0 = arith.constant 0 : i32
    %c0_i32_1 = arith.constant 0 : i32
    return %c0_i32, %c0_i32_0 : i32, i32
  }
  func.func @transform_7(%arg0: i32) -> (i32, i32) {
    %c0_i32 = arith.constant 0 : i32
    %c0_i32_0 = arith.constant 0 : i32
    return %arg0, %c0_i32 : i32, i32
  }
}

</mosaic_0001>

<llo_original>
// kernel: mlp_forward.1
$region0: #{mlp_forward.1}
  #allocation0 [shape = 'u32[]', space=smem, size = 0x4, offset = 0x4, fixed_abs, tag = 'smem constant byte address 0x4 - core index']
  #allocation1 [shape = 'u32[144,128]{1,0:T(1,128)}', space=vmem, size = 0x12000, scoped, tag = 'internal scratch']
  #allocation2 [shape = 'f32[1,1]{1,0:T(1,128)S(1)}', space=vmem, size = 0x200, scoped, tag = 'scoped memory for mlp_forward.1']
  %s0 = inlined_call_operand.vmem [shape: f32[8,2], index: 0, kind: input, shape index: {}]
  %s1 = inlined_call_operand.vmem [shape: f32[2,128], index: 1, kind: input, shape index: {}]
  %s2 = inlined_call_operand.vmem [shape: f32[1,128], index: 2, kind: input, shape index: {}]
  %s3 = inlined_call_operand.hbm [shape: bf16[128,128], index: 3, kind: input, shape index: {}]
  %s4 = inlined_call_operand.vmem [shape: f32[1,128], index: 4, kind: input, shape index: {}]
  %s5 = inlined_call_operand.vmem [shape: f32[1,128], index: 5, kind: input, shape index: {}]
  %s6 = inlined_call_operand.<no memory space> [shape: f32[1,1], index: 6, kind: input, shape index: {}]
  %s7 = inlined_call_operand.vmem [shape: f32[8,1], index: 7, kind: output, shape index: {}]
  %s8 = sld [smem:[#allocation0]]
  $region42: #{mlp_forward.1} parent=0
    _
  %s10 = ssub.s32 1, %s8
  %s11 = scalar_select 0, %s10, %s8
  %v12 = vstv %s6
  %13 = vst [vmem:[#allocation2] sm:$0x1] %v12
  $region1: #{mlp_forward.1} parent=0
    #allocation3 [shape = 'u8[32768]{0}', space=vmem, size = 0x8000, scoped, tag = 'input window, operand 3, single buffered']
    #allocation4 [shape = 's32[1]{0}', space=sflag, size = 0x4, scoped, tag = 'scoped memory for mlp_forward.1']
    %14 = vsyncpa [#allocation4], 0
    // Predicated region
    $region2: #{mlp_forward.1} parent=1 // pred_check
      _
    $region3: #{mlp_forward.1} parent=1 // pred_check_branch
      %16 = sbr.rel (0) target = $region5
    $region4: #{mlp_forward.1} parent=1 // pred_region
      _
    $region5: #{mlp_forward.1} parent=1 // pred_fallthru
      _
    // Predicated region
    $region6: #{mlp_forward.1} parent=1 // pred_check
      _
    $region7: #{mlp_forward.1} parent=1 // pred_check_branch
      %18 = sbr.rel (0) target = $region9
    $region8: #{mlp_forward.1} parent=1 // pred_region
      _
    $region9: #{mlp_forward.1} parent=1 // pred_fallthru
      _
    // Predicated region
    $region10: #{mlp_forward.1} parent=1 // pred_check
      _
    $region11: #{mlp_forward.1} parent=1 // pred_check_branch
      %20 = sbr.rel (0) target = $region13
    $region12: #{mlp_forward.1} parent=1 // pred_region
      _
    $region13: #{mlp_forward.1} parent=1 // pred_fallthru
      _
    // Predicated region
    $region14: #{mlp_forward.1} parent=1 // pred_check
      _
    $region15: #{mlp_forward.1} parent=1 // pred_check_branch
      %22 = sbr.rel (0) target = $region17
    $region16: #{mlp_forward.1} parent=1 // pred_region
      %s24 = ssub.s32 1024, 1024
      %25 = vsyncadd [#allocation4], %s24
      %s26 = sshll.u32 [#allocation3], 4
      %s27 = int_to_ptr.vmem [resolvable:$true] %s26
      %32 = dma.hbm_to_vmem [thread:$0]  %s3, 1024, %s27, [#allocation4], 64, 64, 4
    $region17: #{mlp_forward.1} parent=1 // pred_fallthru
      _
    // Predicated region
    $region18: #{mlp_forward.1} parent=1 // pred_check
      _
    $region19: #{mlp_forward.1} parent=1 // pred_check_branch
      %34 = sbr.rel (0) target = $region21
    $region20: #{mlp_forward.1} parent=1 // pred_region
      _
    $region21: #{mlp_forward.1} parent=1 // pred_fallthru
      _
    // Predicated region
    $region22: #{mlp_forward.1} parent=1 // pred_check
      _
    $region23: #{mlp_forward.1} parent=1 // pred_check_branch
      %36 = sbr.rel (0) target = $region25
    $region24: #{mlp_forward.1} parent=1 // pred_region
      _
    $region25: #{mlp_forward.1} parent=1 // pred_fallthru
      _
    // Predicated region
    $region26: #{mlp_forward.1} parent=1 // pred_check
      _
    $region27: #{mlp_forward.1} parent=1 // pred_check_branch
      %38 = sbr.rel (0) target = $region29
    $region28: #{mlp_forward.1} parent=1 // pred_region
      _
    $region29: #{mlp_forward.1} parent=1 // pred_fallthru
      _
    // Predicated region
    $region30: #{mlp_forward.1} parent=1 // pred_check
      _
    $region31: #{mlp_forward.1} parent=1 // pred_check_branch
      %40 = sbr.rel (0) target = $region33
    $region32: #{mlp_forward.1} parent=1 // pred_region
      %41 = dma.done [#allocation4], 1024
    $region33: #{mlp_forward.1} parent=1 // pred_fallthru
      _
    %v43 = vld [vmem:[%s0] sm:$0xff]
    %v44 = vld [vmem:[%s1] sm:$0x3]
    %v45 = vld [vmem:[%s2] sm:$0x1]
    %47 = vset.pattern.permute.xlu0 0
    %48 = vperm.xlu0 %47, %v43
    %v49 = vpop.permute.xlu0 %48
    %v51 = vlaneseq
    %v52 = vshrl.u32 %v51, 7
    %v53 = vsub.s32 0, %v52
    %v54 = vrot.slane %v44, %v53
    %v55 = vmul.f32 %v49, %v54
    %v57 = vlaneseq
    %v58 = vshrl.u32 %v57, 7
    %v59 = vsub.s32 0, %v58
    %v60 = vrot.slane %v45, %v59
    %v62 = vadd.f32 %v60, %v55
    %63 = vset.pattern.permute.xlu0 1
    %64 = vperm.xlu0 %63, %v43
    %v65 = vpop.permute.xlu0 %64
    %v67 = vlaneseq
    %v68 = vshrl.u32 %v67, 7
    %v69 = vsub.s32 1, %v68
    %v70 = vrot.slane %v44, %v69
    %v71 = vmul.f32 %v65, %v70
    %v72 = vadd.f32 %v62, %v71
    %v73 = vmul.f32 %v72, 0.01
    %v74 = vmax.f32 %v72, %v73
    %v75 = vpack.c.bf16 %v74, %v74
    %v76 = vld [vmem:[#allocation3] sm:$0xf]
    %v77 = vld [vmem:[#allocation3 + $0x4] sm:$0xf]
    %v78 = vld [vmem:[#allocation3 + $0x8] sm:$0xf]
    %v79 = vld [vmem:[#allocation3 + $0xc] sm:$0xf]
    %v80 = vld [vmem:[#allocation3 + $0x10] sm:$0xf]
    %v81 = vld [vmem:[#allocation3 + $0x14] sm:$0xf]
    %v82 = vld [vmem:[#allocation3 + $0x18] sm:$0xf]
    %v83 = vld [vmem:[#allocation3 + $0x1c] sm:$0xf]
    %v84 = vld [vmem:[#allocation3 + $0x20] sm:$0xf]
    %v85 = vld [vmem:[#allocation3 + $0x24] sm:$0xf]
    %v86 = vld [vmem:[#allocation3 + $0x28] sm:$0xf]
    %v87 = vld [vmem:[#allocation3 + $0x2c] sm:$0xf]
    %v88 = vld [vmem:[#allocation3 + $0x30] sm:$0xf]
    %v89 = vld [vmem:[#allocation3 + $0x34] sm:$0xf]
    %v90 = vld [vmem:[#allocation3 + $0x38] sm:$0xf]
    %v91 = vld [vmem:[#allocation3 + $0x3c] sm:$0xf]
    %v92 = vld [vmem:[%s4] sm:$0x1]
    %v94 = vlaneseq
    %v95 = vshrl.u32 %v94, 7
    %v96 = vsub.s32 0, %v95
    %v97 = vrot.slane %v92, %v96
    %v115 = vunpack.c.l.b16 %v76
    %v116 = vunpack.c.l.b16 %v77
    %v117 = vunpack.c.l.b16 %v78
    %v118 = vunpack.c.l.b16 %v79
    %v119 = vunpack.c.l.b16 %v80
    %v120 = vunpack.c.l.b16 %v81
    %v121 = vunpack.c.l.b16 %v82
    %v122 = vunpack.c.l.b16 %v83
    %v123 = vunpack.c.l.b16 %v84
    %v124 = vunpack.c.l.b16 %v85
    %v125 = vunpack.c.l.b16 %v86
    %v126 = vunpack.c.l.b16 %v87
    %v127 = vunpack.c.l.b16 %v88
    %v128 = vunpack.c.l.b16 %v89
    %v129 = vunpack.c.l.b16 %v90
    %v130 = vunpack.c.l.b16 %v91
    %v131 = vpack.c.b16 %v116, %v115
    %v132 = vpack.c.b16 %v118, %v117
    %v133 = vpack.c.b16 %v120, %v119
    %v134 = vpack.c.b16 %v122, %v121
    %v135 = vpack.c.b16 %v124, %v123
    %v136 = vpack.c.b16 %v126, %v125
    %v137 = vpack.c.b16 %v128, %v127
    %v138 = vpack.c.b16 %v130, %v129
    %147 = vmatprep.subr.bf16.mxu0 0
    %148 = vmatpush1.bf16.msra.mxu0 %v131
    %149 = vmatprep.subr.bf16.mxu0 0
    %150 = vmatpush1.bf16.msra.mxu0 %v132
    %151 = vmatprep.subr.bf16.mxu0 0
    %152 = vmatpush1.bf16.msra.mxu0 %v133
    %153 = vmatprep.subr.bf16.mxu0 0
    %154 = vmatpush1.bf16.msra.mxu0 %v134
    %155 = vmatprep.subr.bf16.mxu0 0
    %156 = vmatpush1.bf16.msra.mxu0 %v135
    %157 = vmatprep.subr.bf16.mxu0 0
    %158 = vmatpush1.bf16.msra.mxu0 %v136
    %159 = vmatprep.subr.bf16.mxu0 0
    %160 = vmatpush1.bf16.msra.mxu0 %v137
    %161 = vmatprep.subr.bf16.mxu0 0
    %162 = vmatpush1.bf16.msra.mxu0 %v138
    %163 = vmatprep.subr.bf16.mxu0 0
    %164 = vmatpush1.bf16.msra.mxu0 0
    %165 = vmatprep.subr.bf16.mxu0 0
    %166 = vmatpush1.bf16.msra.mxu0 0
    %167 = vmatprep.subr.bf16.mxu0 0
    %168 = vmatpush1.bf16.msra.mxu0 0
    %169 = vmatprep.subr.bf16.mxu0 0
    %170 = vmatpush1.bf16.msra.mxu0 0
    %171 = vmatprep.subr.bf16.mxu0 0
    %172 = vmatpush1.bf16.msra.mxu0 0
    %173 = vmatprep.subr.bf16.mxu0 0
    %174 = vmatpush1.bf16.msra.mxu0 0
    %175 = vmatprep.subr.bf16.mxu0 0
    %176 = vmatpush1.bf16.msra.mxu0 0
    %177 = vmatprep.subr.bf16.mxu0 0
    %178 = vmatpush1.bf16.msra.mxu0 0
    %179 = vmatprep.mubr.bf16.mxu0 0
    %180 = vmatmul.mubr.bf16.gmra.mrb[0].mxu0 %v75
    %v181 = vpop.f32.mrb[0].mxu0
    %v182 = vadd.f32 %v97, %v181
    %v183 = vpop.f32.mrb[0].mxu0
    %v184 = vpop.f32.mrb[0].mxu0
    %v185 = vpop.f32.mrb[0].mxu0
    %186 = vdwg.mxu0
    %v187 = vmul.f32 %v182, 0.01
    %v188 = vmax.f32 %v182, %v187
    %v189 = vld [vmem:[%s5] sm:$0x1]
    %v191 = vlaneseq
    %v192 = vshrl.u32 %v191, 7
    %v193 = vsub.s32 0, %v192
    %v194 = vrot.slane %v189, %v193
    %v196 = vmul.f32 %v188, %v194
    %197 = vadd.xlane.f32.xlu0 %v196
    %v198 = vpop.xlane.xlu0 %197
    %v199 = vld [vmem:[#allocation2] sm:$0x1]
    %v201 = vlaneseq
    %v202 = vshrl.u32 %v201, 7
    %v203 = vsub.s32 0, %v202
    %v204 = vrot.slane %v199, %v203
    %v206 = vadd.f32 %v198, %v204
    %vm207 = vcmask 7168
    %208 = vst.msk [vmem:[%s7] sm:$0xff] %vm207, %v206
    // Predicated region
    $region34: #{mlp_forward.1} parent=1 // pred_check
      _
    $region35: #{mlp_forward.1} parent=1 // pred_check_branch
      %210 = sbr.rel (0) target = $region37
    $region36: #{mlp_forward.1} parent=1 // pred_region
      _
    $region37: #{mlp_forward.1} parent=1 // pred_fallthru
      _
    // Predicated region
    $region38: #{mlp_forward.1} parent=1 // pred_check
      _
    $region39: #{mlp_forward.1} parent=1 // pred_check_branch
      %212 = sbr.rel (0) target = $region41
    $region40: #{mlp_forward.1} parent=1 // pred_region
      _
    $region41: #{mlp_forward.1} parent=1 // pred_fallthru
      _
    %213 = vsyncpa [#allocation4], 1

</llo_original>
